<compile_context>
chip_gen: v6e
topology: v6e:2x2x1
jax: 0.10.0
libtpu: 0.0.40
codegen_flags: <defaults>
</compile_context>

<pallas_src>
import math
from functools import partial

import jax
import jax.numpy as jnp
from jax.experimental import pallas as pl
from jax.experimental.pallas import tpu as pltpu

_LANES = 128
_TARGET_BLOCK_BYTES = 8 << 20   # ~8 MiB blocks: step overhead <7% on v7x
_VMEM_HEADROOM = 4 << 20        # compiler-internal scratch headroom


def _round_up(a, m):
    return ((a + m - 1) // m) * m


def _relun_kernel(x_ref, o_ref, *, upper_bound):
    x = x_ref[...]
    y = jnp.maximum(x, jnp.zeros((), x.dtype))
    if math.isfinite(upper_bound):
        # NOTE: for integer dtypes a non-integral bound truncates; a NaN
        # upper_bound is treated as +inf (plain ReLU) via math.isfinite.
        y = jnp.minimum(y, jnp.asarray(upper_bound, x.dtype))
    o_ref[...] = y


def relun(x, upper_bound=math.inf, *, inplace=False):
    """min(max(0, x), upper_bound), elementwise; same shape/dtype as x."""
    orig_shape = x.shape
    dtype = x.dtype
    n = x.size
    if n == 0:
        return x

    itemsize = jnp.dtype(dtype).itemsize
    # Minimum sublane multiple for packed dtypes: 8 (f32), 16 (bf16), 32 (int8).
    sub_mult = 8 * max(1, 4 // itemsize)

    # ---- Canonical 3-D view (P, H, W): leading-dim reshapes only (bitcast) ---
    if x.ndim == 0:
        xv = x.reshape(1, 1, 1)
    elif x.ndim == 1:
        # TODO(synk): a rank-1 view may relayout on some XLA layouts; activations
        # are >=2-D in practice so the common paths stay copy-free.
        xv = x.reshape(1, 1, orig_shape[0])
    elif x.ndim == 2:
        xv = x.reshape(1, orig_shape[0], orig_shape[1])
    else:
        lead = int(math.prod(orig_shape[:-2]))
        xv = x.reshape(lead, orig_shape[-2], orig_shape[-1])
    P, H, W = xv.shape

    padded_w = _round_up(W, _LANES)
    padded_h = _round_up(H, sub_mult)
    slab = sub_mult * itemsize            # bytes of one (sub_mult x 1) column

    # ---- Lane (last) dim: full extent if one row-tile slab fits the budget ---
    if padded_w * slab <= _TARGET_BLOCK_BYTES:
        bw = W                            # full extent -> long unmasked vst runs
    else:
        bw = max(_LANES, ((_TARGET_BLOCK_BYTES // slab) // _LANES) * _LANES)
        if bw >= W:
            bw = W
    bw_pad = padded_w if bw == W else bw

    # ---- Sublane (second-to-last) dim ----------------------------------------
    row_bytes = bw_pad * itemsize
    rows_fit = max(sub_mult, _TARGET_BLOCK_BYTES // row_bytes)
    if rows_fit >= padded_h:
        bh = H                            # full extent
    else:
        bh = max(sub_mult, (rows_fit // sub_mult) * sub_mult)
        if bh >= H:
            bh = H
    bh_pad = padded_h if bh == H else bh

    # ---- Plane (merged leading) dim -------------------------------------------
    plane_bytes = bh_pad * bw_pad * itemsize
    bp = int(max(1, min(P, _TARGET_BLOCK_BYTES // plane_bytes)))

    gp, gh, gw = pl.cdiv(P, bp), pl.cdiv(H, bh), pl.cdiv(W, bw)

    # ---- Guarantee >=2 blocks when possible (v7x has 2 TensorCores) ----------
    if gp * gh * gw == 1:
        if P >= 2:
            bp = pl.cdiv(P, 2)
            gp = pl.cdiv(P, bp)
        elif H >= 2 * sub_mult:
            bh = _round_up(pl.cdiv(H, 2), sub_mult)
            gh = pl.cdiv(H, bh)
        elif W >= 2 * _LANES:
            bw = _round_up(pl.cdiv(W, 2), _LANES)
            gw = pl.cdiv(W, bw)

    # ---- Tight VMEM budget: 2x in + 2x out double-buffers + headroom ---------
    bw_pad = padded_w if bw == W else _round_up(bw, _LANES)
    bh_pad = padded_h if bh == H else _round_up(bh, sub_mult)
    block_bytes = bp * bh_pad * bw_pad * itemsize
    vmem_limit = int(max(8 << 20, min(4 * block_bytes + _VMEM_HEADROOM, 128 << 20)))

    block_shape = (bp, bh, bw)
    spec = pl.BlockSpec(block_shape, lambda p, h, w: (p, h, w))
    kernel = partial(_relun_kernel, upper_bound=float(upper_bound))

    # TODO(synk): with inplace=True the alias is on the (bitcast) 3-D view, not
    # the caller's buffer; in JAX "inplace" is only a buffer-reuse hint anyway.
    out = pl.pallas_call(
        kernel,
        out_shape=jax.ShapeDtypeStruct(xv.shape, dtype),
        grid_spec=pltpu.PrefetchScalarGridSpec(
            num_scalar_prefetch=0,
            grid=(gp, gh, gw),
            in_specs=[spec],
            out_specs=spec,
        ),
        compiler_params=pltpu.CompilerParams(
            dimension_semantics=("parallel", "parallel", "parallel"),
            vmem_limit_bytes=vmem_limit,
        ),
        cost_estimate=pl.CostEstimate(
            flops=2 * n if math.isfinite(upper_bound) else n,
            transcendentals=0,
            bytes_accessed=2 * n * itemsize,
        ),
        input_output_aliases={0: 0} if inplace else {},
    )(xv)

    return out.reshape(orig_shape)


if __name__ == "__main__":
    key = jax.random.PRNGKey(0)
    # NCHW conv activation, as the PyTorch module would see it.
    x = jax.random.normal(key, (2, 4, 16, 16), dtype=jnp.float32) * 4.0

    # ReLU6-style bound.
    out = jax.block_until_ready(relun(x, upper_bound=6.0))
    ref = jnp.clip(x, 0.0, 6.0)
    assert out.shape == x.shape and out.dtype == x.dtype
    assert jnp.allclose(out, ref), "mismatch vs reference (bounded)"

    # Default upper_bound=inf -> plain ReLU.
    out_inf = jax.block_until_ready(relun(x))
    assert jnp.allclose(out_inf, jnp.maximum(x, 0.0)), "mismatch vs ReLU"

    # In-place (aliased output) variant, mirroring the module's inplace=True.
    out_ip = jax.block_until_ready(relun(x, upper_bound=6.0, inplace=True))
    assert jnp.allclose(out_ip, ref), "mismatch vs reference (inplace)"

    # Ragged size exercises the masked partial-plane path (no pad/slice passes).
    y = jax.random.normal(jax.random.PRNGKey(1), (3, 5, 7), dtype=jnp.float32) * 4.0
    out_y = jax.block_until_ready(relun(y, upper_bound=4.0))
    assert jnp.allclose(out_y, jnp.clip(y, 0.0, 4.0)), "mismatch vs ref (ragged)"

    # 2-D bf16 path: row-tiled with a masked partial last block.
    z = jax.random.normal(jax.random.PRNGKey(2), (40, 256), dtype=jnp.bfloat16) * 4.0
    out_z = jax.block_until_ready(relun(z, upper_bound=6.0))
    ref_z = jnp.clip(z.astype(jnp.float32), 0.0, 6.0)
    assert out_z.dtype == z.dtype
    assert jnp.allclose(out_z.astype(jnp.float32), ref_z), "mismatch (bf16 2-D)"

    print("KERNEL_OK")
</pallas_src>

<mosaic_0001>
module attributes {stable_mosaic.version = 11 : i64} {
  func.func @_relun_kernel(%arg0: i32, %arg1: i32, %arg2: i32, %arg3: memref<4x16x16xf32, #tpu.memory_space<vmem>>, %arg4: memref<4x16x16xf32, #tpu.memory_space<vmem>>) attributes {dimension_semantics = [#tpu.dimension_semantics<parallel>, #tpu.dimension_semantics<parallel>, #tpu.dimension_semantics<parallel>], iteration_bounds = array<i64: 2, 1, 1>, scalar_prefetch = 0 : i64, scratch_operands = 0 : i64, tpu.core_type = #tpu.core_type<tc>, window_params = [{transform_indices = @transform_0, window_bounds = array<i64: 4, 16, 16>}, {transform_indices = @transform_1, window_bounds = array<i64: 4, 16, 16>}]} {
    %c0 = arith.constant 0 : index
    %c0_0 = arith.constant 0 : index
    %c0_1 = arith.constant 0 : index
    %0 = vector.load %arg3[%c0, %c0_0, %c0_1] : memref<4x16x16xf32, #tpu.memory_space<vmem>>, vector<4x16x16xf32>
    %cst = arith.constant 0.000000e+00 : f32
    %1 = vector.broadcast %cst : f32 to vector<4x16x16xf32>
    %2 = arith.maximumf %0, %1 : vector<4x16x16xf32>
    %cst_2 = arith.constant 6.000000e+00 : f32
    %3 = vector.broadcast %cst_2 : f32 to vector<4x16x16xf32>
    %4 = arith.minimumf %2, %3 : vector<4x16x16xf32>
    %c0_3 = arith.constant 0 : index
    %c0_4 = arith.constant 0 : index
    %c0_5 = arith.constant 0 : index
    %5 = vector.load %arg4[%c0_3, %c0_4, %c0_5] : memref<4x16x16xf32, #tpu.memory_space<vmem>>, vector<4x16x16xf32>
    tpu.vector_store %arg4[%c0_3, %c0_4, %c0_5], %4 {strides = array<i32>} : memref<4x16x16xf32, #tpu.memory_space<vmem>>, vector<4x16x16xf32>,
    return
  }
  func.func @transform_0(%arg0: i32, %arg1: i32, %arg2: i32) -> (i32, i32, i32) {
    %c0_i32 = arith.constant 0 : i32
    return %arg0, %arg1, %arg2 : i32, i32, i32
  }
  func.func @transform_1(%arg0: i32, %arg1: i32, %arg2: i32) -> (i32, i32, i32) {
    %c0_i32 = arith.constant 0 : i32
    return %arg0, %arg1, %arg2 : i32, i32, i32
  }
}

</mosaic_0001>

<llo_original>
// kernel: tpu_custom_call.1
$region0: #{tpu_custom_call.1}
  #allocation0 [shape = 'u32[]', space=smem, size = 0x4, offset = 0x4, fixed_abs, tag = 'smem constant byte address 0x4 - core index']
  #allocation1 [shape = 'u32[144,128]{1,0:T(1,128)}', space=vmem, size = 0x12000, scoped, tag = 'internal scratch']
  %s0 = inlined_call_operand.hbm [shape: f32[8,16,16], index: 0, kind: input, shape index: {}]
  %s1 = inlined_call_operand.hbm [shape: f32[8,16,16], index: 1, kind: output, shape index: {}]
  %s2 = sld [smem:[#allocation0]]
  $region41: #{tpu_custom_call.1} parent=0
    _
  %s4 = ssub.s32 1, %s2
  %s5 = scalar_select 0, %s4, %s2
  $region1: #{tpu_custom_call.1} parent=0
    #allocation2 [shape = 'u8[65536]{0}', space=vmem, size = 0x10000, scoped, tag = 'input window, operand 0']
    #allocation3 [shape = 's32[2]{0}', space=sflag, size = 0x8, scoped, tag = 'scoped memory for tpu_custom_call.1']
    #allocation4 [shape = 's32[2]{0}', space=sflag, size = 0x8, scoped, tag = 'scoped memory for tpu_custom_call.1']
    #allocation5 [shape = 'u8[65536]{0}', space=vmem, size = 0x10000, scoped, tag = 'output window, operand 0']
    %6 = vsyncpa [#allocation3], 0
    %s7 = scalar_lea.sflag [#allocation3], 1
    %8 = vsyncpa %s7, 0
    %9 = vsyncpa [#allocation4], 0
    %s10 = scalar_lea.sflag [#allocation4], 1
    %11 = vsyncpa %s10, 0
    loop: start=0, step=1, limit=4
    $region2: #{tpu_custom_call.1} parent=1 // loop_pre_header
      _
    $region3: #{tpu_custom_call.1} parent=1 // loop_header
      %s13 = sphi 0, %s17
      %p14 = scmp.ge.s32.totalorder %s13, 4
      %s20 = sphi 0, %s39
      %s21 = sphi 0, %s35
      %s22 = sphi 0, %s31
      %s23 = sphi 0, %s20
      %s24 = sphi 0, %s21
      %s25 = sphi 0, %s22
      %s26 = sphi 0, %s23
      %s27 = sphi 0, %s24
      %s28 = sphi 0, %s25
      %s46 = sphi 0, %s48
      %s49 = sphi 0, %s46
      %s50 = sphi 0, %s49
      %s66 = sphi 0, %s50
      %s76 = sphi 0, %s78
      %s79 = sphi 0, %s76
      %s80 = sphi 0, %s79
      %s96 = sphi 0, %s80
    $region4: #{tpu_custom_call.1} parent=1 // loop_header_branch
      %16 = sbr.rel (%p14) target = $region8
    $region5: #{tpu_custom_call.1} parent=1 // loop_body
      %s18 = ssub.s32 %s13, 1
      %s19 = ssub.s32 %s13, 2
      %s29 = sadd.s32 1, %s22
      %p30 = scmp.ge.s32.totalorder %s29, 1
      %s31 = scalar_select %p30, 0, %s29
      %s32 = sadd.s32 1, %s21
      %s33 = scalar_select %p30, %s32, %s21
      %p34 = scmp.ge.s32.totalorder %s33, 1
      %s35 = scalar_select %p34, 0, %s33
      %s36 = sadd.s32 1, %s20
      %s37 = scalar_select %p34, %s36, %s20
      %p38 = scmp.ge.s32.totalorder %s37, 2
      %s39 = scalar_select %p38, 0, %s37
      %s40 = ssub.s32 %s20, %s39
      %s41 = ssub.s32 %s21, %s35
      %s42 = sor.u32 %s40, %s41
      %s43 = ssub.s32 %s22, %s31
      %s44 = sor.u32 %s42, %s43
      %p45 = scmp.eq.s32.totalorder %s44, 0
      %s47 = sadd.s32 %s46, 1
      %s48 = scalar_select %p45, %s46, %s47
      %p51 = pneg %p45
      %p52 = scmp.eq.s32.totalorder %s13, 1
      %p53 = por %p51, %p52
      %p54 = scmp.ne.s32.totalorder %s46, %s49
      %p55 = scmp.eq.s32.totalorder %s13, 0
      %p56 = por %p54, %p55
      %p57 = scmp.ne.s32.totalorder %s46, %s49
      %p58 = scmp.eq.s32.totalorder %s18, 1
      %p59 = por %p57, %p58
      %p60 = scmp.ne.s32.totalorder %s49, %s50
      %p61 = scmp.eq.s32.totalorder %s18, 0
      %p62 = por %p60, %p61
      %p63 = scmp.ne.s32.totalorder %s49, %s50
      %p64 = scmp.eq.s32.totalorder %s19, 1
      %p65 = por %p63, %p64
      %p67 = scmp.ne.s32.totalorder %s50, %s66
      %p68 = scmp.eq.s32.totalorder %s19, 0
      %p69 = por %p67, %p68
      %s70 = ssub.s32 %s20, %s39
      %s71 = ssub.s32 %s21, %s35
      %s72 = sor.u32 %s70, %s71
      %s73 = ssub.s32 %s22, %s31
      %s74 = sor.u32 %s72, %s73
      %p75 = scmp.eq.s32.totalorder %s74, 0
      %s77 = sadd.s32 %s76, 1
      %s78 = scalar_select %p75, %s76, %s77
      %p81 = pneg %p75
      %p82 = scmp.eq.s32.totalorder %s13, 1
      %p83 = por %p81, %p82
      %p84 = scmp.ne.s32.totalorder %s76, %s79
      %p85 = scmp.eq.s32.totalorder %s13, 0
      %p86 = por %p84, %p85
      %p87 = scmp.ne.s32.totalorder %s76, %s79
      %p88 = scmp.eq.s32.totalorder %s18, 1
      %p89 = por %p87, %p88
      %p90 = scmp.ne.s32.totalorder %s79, %s80
      %p91 = scmp.eq.s32.totalorder %s18, 0
      %p92 = por %p90, %p91
      %p93 = scmp.ne.s32.totalorder %s79, %s80
      %p94 = scmp.eq.s32.totalorder %s19, 1
      %p95 = por %p93, %p94
      %p97 = scmp.ne.s32.totalorder %s80, %s96
      %p98 = scmp.eq.s32.totalorder %s19, 0
      %p99 = por %p97, %p98
      %p100 = scmp.le.s32.totalorder 1, %s13
      %p101 = scmp.lt.s32.totalorder %s13, 3
      %p102 = pnand %p100, %p101
      %p103 = pneg %p102
      // Predicated region
      $region9: #{tpu_custom_call.1} parent=5 // pred_check
        _
      $region10: #{tpu_custom_call.1} parent=5 // pred_check_branch
        %105 = sbr.rel (%p102) target = $region12
      $region11: #{tpu_custom_call.1} parent=5 // pred_region
        %s106 = ssub.s32 %s13, 1
      $region12: #{tpu_custom_call.1} parent=5 // pred_fallthru
        _
      %p107 = scmp.lt.s32.totalorder %s13, 2
      // Predicated region
      $region13: #{tpu_custom_call.1} parent=5 // pred_check
        %p108 = pneg %p107
      $region14: #{tpu_custom_call.1} parent=5 // pred_check_branch
        %110 = sbr.rel (%p108) target = $region16
      $region15: #{tpu_custom_call.1} parent=5 // pred_region
        // Predicated region
        $region17: #{tpu_custom_call.1} parent=15 // pred_check
          %p111 = pneg %p56
        $region18: #{tpu_custom_call.1} parent=15 // pred_check_branch
          %113 = sbr.rel (%p111) target = $region20
        $region19: #{tpu_custom_call.1} parent=15 // pred_region
          %s114 = sand.u32 %s46, 1
          %s115 = scalar_lea.sflag [#allocation3], %s114
          %s116 = sand.u32 %s46, 1
          %s117 = smul.addr %s116, 64
          %s118 = scalar_lea.vmem [#allocation2], %s117
          %s119 = smul.u32 4, %s20
          %s120 = smul.u32 2, %s21
          %s122 = ssub.s32 1024, 1024
          %123 = vsyncadd %s115, %s122
          %s124 = sadd.s32 %s22, %s120
          %s125 = smul.addr %s119, 2
          %s126 = sadd.s32 %s124, %s125
          %s127 = smul.addr %s126, 128
          %s128 = scalar_lea.hbm %s0, %s127
          %s129 = sshll.u32 %s118, 4
          %s130 = int_to_ptr.vmem [resolvable:$true] %s129
          %135 = dma.hbm_to_vmem [thread:$0]  %s128, 1024, %s130, %s115, 128, 128, 8
        $region20: #{tpu_custom_call.1} parent=15 // pred_fallthru
          _
      $region16: #{tpu_custom_call.1} parent=5 // pred_fallthru
        _
      %p136 = scmp.le.s32.totalorder 1, %s13
      %p137 = scmp.lt.s32.totalorder %s13, 3
      %p138 = pnand %p136, %p137
      %p139 = pneg %p138
      // Predicated region
      $region21: #{tpu_custom_call.1} parent=5 // pred_check
        _
      $region22: #{tpu_custom_call.1} parent=5 // pred_check_branch
        %141 = sbr.rel (%p138) target = $region24
      $region23: #{tpu_custom_call.1} parent=5 // pred_region
        %s142 = ssub.s32 %s13, 1
        %s143 = sand.u32 %s49, 1
        %s144 = scalar_lea.sflag [#allocation3], %s143
        %s145 = sand.u32 %s49, 1
        %s146 = smul.addr %s145, 64
        %s147 = scalar_lea.vmem [#allocation2], %s146
        // Predicated region
        $region25: #{tpu_custom_call.1} parent=23 // pred_check
          %p148 = pneg %p62
        $region26: #{tpu_custom_call.1} parent=23 // pred_check_branch
          %150 = sbr.rel (%p148) target = $region28
        $region27: #{tpu_custom_call.1} parent=23 // pred_region
          %151 = dma.done %s144, 1024
        $region28: #{tpu_custom_call.1} parent=23 // pred_fallthru
          _
        %s152 = sand.u32 %s49, 1
        %s153 = scalar_lea.sflag [#allocation3], %s152
        %s154 = sand.u32 %s49, 1
        %s155 = smul.addr %s154, 64
        %s156 = scalar_lea.vmem [#allocation2], %s155
        %p157 = pneg %p62
        %p158 = pneg %p59
        %p159 = pneg %p92
        %p160 = pneg %p89
        %s161 = sand.u32 %s79, 1
        %s162 = scalar_lea.sflag [#allocation4], %s161
        %s163 = sand.u32 %s79, 1
        %s164 = smul.addr %s163, 64
        %s165 = scalar_lea.vmem [#allocation5], %s164
        %s166 = smul.u32 4, %s23
        %s167 = smul.u32 2, %s24
        %s168 = smul.u32 4, %s23
        %s169 = smul.u32 2, %s24
        %v170 = vld [vmem:[%s147] sm:$0xff]
        %v171 = vld [vmem:[%s147 + $0x8] sm:$0xff]
        %v172 = vld [vmem:[%s147 + $0x10] sm:$0xff]
        %v173 = vld [vmem:[%s147 + $0x18] sm:$0xff]
        %v174 = vld [vmem:[%s147 + $0x20] sm:$0xff]
        %v175 = vld [vmem:[%s147 + $0x28] sm:$0xff]
        %v176 = vld [vmem:[%s147 + $0x30] sm:$0xff]
        %v177 = vld [vmem:[%s147 + $0x38] sm:$0xff]
        %v178 = vmax.f32 %v170, 0.0
        %v179 = vmax.f32 %v171, 0.0
        %v180 = vmax.f32 %v172, 0.0
        %v181 = vmax.f32 %v173, 0.0
        %v182 = vmax.f32 %v174, 0.0
        %v183 = vmax.f32 %v175, 0.0
        %v184 = vmax.f32 %v176, 0.0
        %v185 = vmax.f32 %v177, 0.0
        %v186 = vmin.f32 %v178, 6.0
        %v187 = vmin.f32 %v179, 6.0
        %v188 = vmin.f32 %v180, 6.0
        %v189 = vmin.f32 %v181, 6.0
        %v190 = vmin.f32 %v182, 6.0
        %v191 = vmin.f32 %v183, 6.0
        %v192 = vmin.f32 %v184, 6.0
        %v193 = vmin.f32 %v185, 6.0
        %vm194 = vcmask 130048
        %195 = vst.msk [vmem:[%s165] sm:$0xff] %vm194, %v186
        %196 = vst.msk [vmem:[%s165 + $0x8] sm:$0xff] %vm194, %v187
        %197 = vst.msk [vmem:[%s165 + $0x10] sm:$0xff] %vm194, %v188
        %198 = vst.msk [vmem:[%s165 + $0x18] sm:$0xff] %vm194, %v189
        %199 = vst.msk [vmem:[%s165 + $0x20] sm:$0xff] %vm194, %v190
        %200 = vst.msk [vmem:[%s165 + $0x28] sm:$0xff] %vm194, %v191
        %201 = vst.msk [vmem:[%s165 + $0x30] sm:$0xff] %vm194, %v192
        %202 = vst.msk [vmem:[%s165 + $0x38] sm:$0xff] %vm194, %v193
        %s203 = sand.u32 %s79, 1
        %s204 = scalar_lea.sflag [#allocation4], %s203
        %s205 = sand.u32 %s79, 1
        %s206 = smul.addr %s205, 64
        %s207 = scalar_lea.vmem [#allocation5], %s206
        // Predicated region
        $region29: #{tpu_custom_call.1} parent=23 // pred_check
          %p208 = pneg %p89
        $region30: #{tpu_custom_call.1} parent=23 // pred_check_branch
          %210 = sbr.rel (%p208) target = $region32
        $region31: #{tpu_custom_call.1} parent=23 // pred_region
          %s211 = smul.u32 4, %s23
          %s212 = smul.u32 2, %s24
          %s214 = ssub.s32 1024, 1024
          %215 = vsyncadd %s204, %s214
          %s216 = sadd.s32 %s25, %s212
          %s217 = smul.addr %s211, 2
          %s218 = sadd.s32 %s216, %s217
          %s219 = smul.addr %s218, 128
          %s220 = scalar_lea.hbm %s1, %s219
          %s221 = sshll.u32 %s207, 4
          %s222 = int_to_ptr.vmem [resolvable:$true] %s221
          %227 = dma.vmem_to_hbm [thread:$0]  %s222, 1024, %s220, %s204, 128, 128, 8
        $region32: #{tpu_custom_call.1} parent=23 // pred_fallthru
          _
      $region24: #{tpu_custom_call.1} parent=5 // pred_fallthru
        _
      %p228 = scmp.le.s32.totalorder 2, %s13
      // Predicated region
      $region33: #{tpu_custom_call.1} parent=5 // pred_check
        %p229 = pneg %p228
      $region34: #{tpu_custom_call.1} parent=5 // pred_check_branch
        %231 = sbr.rel (%p229) target = $region36
      $region35: #{tpu_custom_call.1} parent=5 // pred_region
        %s232 = ssub.s32 %s13, 2
        // Predicated region
        $region37: #{tpu_custom_call.1} parent=35 // pred_check
          %p233 = pneg %p95
        $region38: #{tpu_custom_call.1} parent=35 // pred_check_branch
          %235 = sbr.rel (%p233) target = $region40
        $region39: #{tpu_custom_call.1} parent=35 // pred_region
          %s236 = sand.u32 %s80, 1
          %s237 = scalar_lea.sflag [#allocation4], %s236
          %s238 = sand.u32 %s80, 1
          %s239 = smul.addr %s238, 64
          %s240 = scalar_lea.vmem [#allocation5], %s239
          %241 = dma.done %s237, 1024
        $region40: #{tpu_custom_call.1} parent=35 // pred_fallthru
          _
      $region36: #{tpu_custom_call.1} parent=5 // pred_fallthru
        _
    $region6: #{tpu_custom_call.1} parent=1 // loop_footer
      %s17 = sadd.s32 1, %s13
    $region7: #{tpu_custom_call.1} parent=1 // loop_footer_branch
      %12 = sbr.rel target = $region3
    $region8: #{tpu_custom_call.1} parent=1 // loop_exit
      _
    %242 = vsyncpa [#allocation3], 1
    %s243 = scalar_lea.sflag [#allocation3], 1
    %244 = vsyncpa %s243, 1
    %245 = vsyncpa [#allocation4], 1
    %s246 = scalar_lea.sflag [#allocation4], 1
    %247 = vsyncpa %s246, 1

</llo_original>
